<compile_context>
chip_gen: v5e
topology: v5e:2x2
jax: 0.10.0
libtpu: 0.0.40
codegen_flags: <defaults>
</compile_context>

<pallas_src>
import functools

import jax
import jax.numpy as jnp
from jax.experimental import pallas as pl
from jax.experimental.pallas import tpu as pltpu


def _locked_dropout_kernel(x_ref, m_ref, o_ref):
    # x_ref: (1, tT, H) tile of the input
    # m_ref: (1, 1, H)  scaled keep-mask for this batch element (f32)
    # Broadcast over the time axis -> "locked" dropout.
    o_ref[...] = (x_ref[...].astype(jnp.float32) * m_ref[...]).astype(o_ref.dtype)


def _choose_tile_t(T, H, bytes_per_elem, target_bytes=4 * 1024 * 1024):
    """Pick a T-tile so one (1, tT, H) block is ~4 MiB (HBM-roofline friendly).

    Falls back to the full T when the array is small or T is not a multiple
    of 8 (the (8, 128) tiling rule then requires the full-extent block).
    """
    if T * H * bytes_per_elem <= target_bytes or T % 8 != 0:
        return T
    tT = max(8, (target_bytes // (H * bytes_per_elem)) // 8 * 8)
    tT = min(tT, T)
    while T % tT != 0:   # keep blocks evenly dividing T (no ragged edge)
        tT -= 8
    return max(tT, 8)


@functools.partial(jax.jit, static_argnames=("p",))
def _locked_dropout_impl(x, seed, p):
    B, T, H = x.shape
    keep_prob = 1.0 - p

    # (B, 1, H): one Bernoulli(1-p)/(1-p) value per (batch, hidden), shared
    # ("locked") across the whole sequence — identical to the PyTorch mask.
    key = jax.random.PRNGKey(seed)
    mask = (jax.random.bernoulli(key, keep_prob, (B, 1, H)).astype(jnp.float32)
            * jnp.float32(1.0 / keep_prob))

    tT = _choose_tile_t(T, H, x.dtype.itemsize)
    nT = T // tT

    return pl.pallas_call(
        _locked_dropout_kernel,
        out_shape=jax.ShapeDtypeStruct((B, T, H), x.dtype),
        grid=(B, nT),
        in_specs=[
            pl.BlockSpec((1, tT, H), lambda b, t: (b, t, 0)),   # x tile
            pl.BlockSpec((1, 1, H), lambda b, t: (b, 0, 0)),    # per-batch mask
        ],
        out_specs=pl.BlockSpec((1, tT, H), lambda b, t: (b, t, 0)),
        compiler_params=pltpu.CompilerParams(
            # Every grid step is fully independent -> megacore-splittable.
            dimension_semantics=("parallel", "parallel"),
            # ~4 MiB tiles * (in + out) * double buffering; above v5e's 16 MiB
            # default scoped limit, well under v7x's 64 MiB physical VMEM.
            vmem_limit_bytes=32 * 1024 * 1024,
        ),
    )(x, mask)


def locked_dropout(x, seed, p=0.5, training=True):
    """LockedDropout forward. x: (B, T, H). seed: python int."""
    # TODO(synk): PackedSequence inputs (pad_packed/pack_padded round trip)
    # have no Pallas equivalent; only the dense (B, T, H) path is implemented.
    if not training or p == 0.0:
        return x
    return _locked_dropout_impl(x, seed, float(p))


if __name__ == "__main__":
    # Small shapes consistent with the (B, T, H) RNN-style input of LockedDropout.
    B, T, H = 2, 8, 128
    p = 0.5

    key = jax.random.PRNGKey(0)
    x = jax.random.normal(key, (B, T, H), dtype=jnp.float32)

    out = locked_dropout(x, seed=1234, p=p, training=True)
    out = jax.block_until_ready(out)

    # Sanity checks of LockedDropout semantics:
    #  - every output element is either 0 or x/(1-p)
    #  - the mask is identical across the sequence (time) dimension
    scaled = x / (1.0 - p)
    is_zero = jnp.abs(out) < 1e-6
    is_scaled = jnp.abs(out - scaled) < 1e-4
    assert bool(jnp.all(is_zero | is_scaled)), "output values not in {0, x/(1-p)}"
    safe_x = jnp.where(jnp.abs(x) > 1e-6, x, 1.0)
    mask = jnp.where(jnp.abs(x) > 1e-6, out / safe_x, 0.0)
    assert bool(jnp.all(jnp.abs(mask - mask[:, :1, :]) < 1e-4)), "mask not locked across time"

    # Eval mode / p=0 passthrough
    assert bool(jnp.all(locked_dropout(x, seed=0, p=p, training=False) == x))
    assert bool(jnp.all(locked_dropout(x, seed=0, p=0.0, training=True) == x))

    print("KERNEL_OK")
</pallas_src>

<mosaic_0001>
module attributes {stable_mosaic.version = 11 : i64} {
  func.func @_locked_dropout_kernel(%arg0: i32, %arg1: i32, %arg2: memref<1x8x128xf32, #tpu.memory_space<vmem>>, %arg3: memref<1x1x128xf32, #tpu.memory_space<vmem>>, %arg4: memref<1x8x128xf32, #tpu.memory_space<vmem>>) attributes {dimension_semantics = [#tpu.dimension_semantics<parallel>, #tpu.dimension_semantics<parallel>], iteration_bounds = array<i64: 2, 1>, scalar_prefetch = 0 : i64, scratch_operands = 0 : i64, tpu.core_type = #tpu.core_type<tc>, window_params = [{transform_indices = @transform_0, window_bounds = array<i64: 1, 8, 128>}, {transform_indices = @transform_1, window_bounds = array<i64: 1, 1, 128>}, {transform_indices = @transform_2, window_bounds = array<i64: 1, 8, 128>}]} {
    %c0 = arith.constant 0 : index
    %c0_0 = arith.constant 0 : index
    %c0_1 = arith.constant 0 : index
    %0 = vector.load %arg2[%c0, %c0_0, %c0_1] : memref<1x8x128xf32, #tpu.memory_space<vmem>>, vector<1x8x128xf32>
    %c0_2 = arith.constant 0 : index
    %c0_3 = arith.constant 0 : index
    %c0_4 = arith.constant 0 : index
    %1 = vector.load %arg3[%c0_2, %c0_3, %c0_4] : memref<1x1x128xf32, #tpu.memory_space<vmem>>, vector<1x1x128xf32>
    %2 = vector.broadcast %1 : vector<1x1x128xf32> to vector<1x8x128xf32>
    %3 = arith.mulf %0, %2 : vector<1x8x128xf32>
    %c0_5 = arith.constant 0 : index
    %c0_6 = arith.constant 0 : index
    %c0_7 = arith.constant 0 : index
    %4 = vector.load %arg4[%c0_5, %c0_6, %c0_7] : memref<1x8x128xf32, #tpu.memory_space<vmem>>, vector<1x8x128xf32>
    tpu.vector_store %arg4[%c0_5, %c0_6, %c0_7], %3 {strides = array<i32>} : memref<1x8x128xf32, #tpu.memory_space<vmem>>, vector<1x8x128xf32>,
    return
  }
  func.func @transform_0(%arg0: i32, %arg1: i32) -> (i32, i32, i32) {
    %c0_i32 = arith.constant 0 : i32
    %c0_i32_0 = arith.constant 0 : i32
    return %arg0, %arg1, %c0_i32 : i32, i32, i32
  }
  func.func @transform_1(%arg0: i32, %arg1: i32) -> (i32, i32, i32) {
    %c0_i32 = arith.constant 0 : i32
    %c0_i32_0 = arith.constant 0 : i32
    %c0_i32_1 = arith.constant 0 : i32
    return %arg0, %c0_i32, %c0_i32_0 : i32, i32, i32
  }
  func.func @transform_2(%arg0: i32, %arg1: i32) -> (i32, i32, i32) {
    %c0_i32 = arith.constant 0 : i32
    %c0_i32_0 = arith.constant 0 : i32
    return %arg0, %arg1, %c0_i32 : i32, i32, i32
  }
}

</mosaic_0001>

<llo_original>
// kernel: _locked_dropout_impl.1
$region0: #{_locked_dropout_impl.1}
  #allocation0 [shape = 'u32[]', space=smem, size = 0x4, offset = 0x4, fixed_abs, tag = 'smem constant byte address 0x4 - core index']
  #allocation1 [shape = 'u32[72,128]{1,0:T(1,128)}', space=vmem, size = 0x9000, scoped, tag = 'internal scratch']
  %s0 = inlined_call_operand.vmem [shape: f32[2,8,128], index: 0, kind: input, shape index: {}]
  %s1 = inlined_call_operand.vmem [shape: f32[2,1,128], index: 1, kind: input, shape index: {}]
  %s2 = inlined_call_operand.hbm [shape: f32[2,8,128], index: 2, kind: output, shape index: {}]
  %s3 = sld [smem:[#allocation0]]
  $region41: #{_locked_dropout_impl.1} parent=0
    _
  %s5 = ssub.s32 1, %s3
  %s6 = scalar_select 0, %s5, %s3
  $region1: #{_locked_dropout_impl.1} parent=0
    #allocation2 [shape = 'u8[8192]{0}', space=vmem, size = 0x2000, scoped, tag = 'output window, operand 0']
    #allocation3 [shape = 's32[2]{0}', space=sflag, size = 0x8, scoped, tag = 'scoped memory for _locked_dropout_impl.1']
    %7 = vsyncpa [#allocation3], 0
    %s8 = scalar_lea.sflag [#allocation3], 1
    %9 = vsyncpa %s8, 0
    loop: start=0, step=1, limit=4
    $region2: #{_locked_dropout_impl.1} parent=1 // loop_pre_header
      _
    $region3: #{_locked_dropout_impl.1} parent=1 // loop_header
      %s11 = sphi 0, %s15
      %p12 = scmp.ge.s32.totalorder %s11, 4
      %s18 = sphi 0, %s30
      %s19 = sphi 0, %s26
      %s20 = sphi 0, %s18
      %s21 = sphi 0, %s19
      %s22 = sphi 0, %s20
      %s23 = sphi 0, %s21
      %s35 = sphi 0, %s37
      %s38 = sphi 0, %s35
      %s39 = sphi 0, %s38
      %s55 = sphi 0, %s39
      %s61 = sphi 0, %s63
      %s64 = sphi 0, %s61
      %s65 = sphi 0, %s64
      %s81 = sphi 0, %s65
      %s89 = sphi 0, %s91
      %s92 = sphi 0, %s89
      %s93 = sphi 0, %s92
      %s109 = sphi 0, %s93
    $region4: #{_locked_dropout_impl.1} parent=1 // loop_header_branch
      %14 = sbr.rel (%p12) target = $region8
    $region5: #{_locked_dropout_impl.1} parent=1 // loop_body
      %s16 = ssub.s32 %s11, 1
      %s17 = ssub.s32 %s11, 2
      %s24 = sadd.s32 1, %s19
      %p25 = scmp.ge.s32.totalorder %s24, 1
      %s26 = scalar_select %p25, 0, %s24
      %s27 = sadd.s32 1, %s18
      %s28 = scalar_select %p25, %s27, %s18
      %p29 = scmp.ge.s32.totalorder %s28, 2
      %s30 = scalar_select %p29, 0, %s28
      %s31 = ssub.s32 %s18, %s30
      %s32 = ssub.s32 %s19, %s26
      %s33 = sor.u32 %s31, %s32
      %p34 = scmp.eq.s32.totalorder %s33, 0
      %s36 = sadd.s32 %s35, 1
      %s37 = scalar_select %p34, %s35, %s36
      %p40 = pneg %p34
      %p41 = scmp.eq.s32.totalorder %s11, 1
      %p42 = por %p40, %p41
      %p43 = scmp.ne.s32.totalorder %s35, %s38
      %p44 = scmp.eq.s32.totalorder %s11, 0
      %p45 = por %p43, %p44
      %p46 = scmp.ne.s32.totalorder %s35, %s38
      %p47 = scmp.eq.s32.totalorder %s16, 1
      %p48 = por %p46, %p47
      %p49 = scmp.ne.s32.totalorder %s38, %s39
      %p50 = scmp.eq.s32.totalorder %s16, 0
      %p51 = por %p49, %p50
      %p52 = scmp.ne.s32.totalorder %s38, %s39
      %p53 = scmp.eq.s32.totalorder %s17, 1
      %p54 = por %p52, %p53
      %p56 = scmp.ne.s32.totalorder %s39, %s55
      %p57 = scmp.eq.s32.totalorder %s17, 0
      %p58 = por %p56, %p57
      %s59 = ssub.s32 %s18, %s30
      %p60 = scmp.eq.s32.totalorder %s59, 0
      %s62 = sadd.s32 %s61, 1
      %s63 = scalar_select %p60, %s61, %s62
      %p66 = pneg %p60
      %p67 = scmp.eq.s32.totalorder %s11, 1
      %p68 = por %p66, %p67
      %p69 = scmp.ne.s32.totalorder %s61, %s64
      %p70 = scmp.eq.s32.totalorder %s11, 0
      %p71 = por %p69, %p70
      %p72 = scmp.ne.s32.totalorder %s61, %s64
      %p73 = scmp.eq.s32.totalorder %s16, 1
      %p74 = por %p72, %p73
      %p75 = scmp.ne.s32.totalorder %s64, %s65
      %p76 = scmp.eq.s32.totalorder %s16, 0
      %p77 = por %p75, %p76
      %p78 = scmp.ne.s32.totalorder %s64, %s65
      %p79 = scmp.eq.s32.totalorder %s17, 1
      %p80 = por %p78, %p79
      %p82 = scmp.ne.s32.totalorder %s65, %s81
      %p83 = scmp.eq.s32.totalorder %s17, 0
      %p84 = por %p82, %p83
      %s85 = ssub.s32 %s18, %s30
      %s86 = ssub.s32 %s19, %s26
      %s87 = sor.u32 %s85, %s86
      %p88 = scmp.eq.s32.totalorder %s87, 0
      %s90 = sadd.s32 %s89, 1
      %s91 = scalar_select %p88, %s89, %s90
      %p94 = pneg %p88
      %p95 = scmp.eq.s32.totalorder %s11, 1
      %p96 = por %p94, %p95
      %p97 = scmp.ne.s32.totalorder %s89, %s92
      %p98 = scmp.eq.s32.totalorder %s11, 0
      %p99 = por %p97, %p98
      %p100 = scmp.ne.s32.totalorder %s89, %s92
      %p101 = scmp.eq.s32.totalorder %s16, 1
      %p102 = por %p100, %p101
      %p103 = scmp.ne.s32.totalorder %s92, %s93
      %p104 = scmp.eq.s32.totalorder %s16, 0
      %p105 = por %p103, %p104
      %p106 = scmp.ne.s32.totalorder %s92, %s93
      %p107 = scmp.eq.s32.totalorder %s17, 1
      %p108 = por %p106, %p107
      %p110 = scmp.ne.s32.totalorder %s93, %s109
      %p111 = scmp.eq.s32.totalorder %s17, 0
      %p112 = por %p110, %p111
      %p113 = scmp.le.s32.totalorder 1, %s11
      %p114 = scmp.lt.s32.totalorder %s11, 3
      %p115 = pnand %p113, %p114
      %p116 = pneg %p115
      // Predicated region
      $region9: #{_locked_dropout_impl.1} parent=5 // pred_check
        _
      $region10: #{_locked_dropout_impl.1} parent=5 // pred_check_branch
        %118 = sbr.rel (%p115) target = $region12
      $region11: #{_locked_dropout_impl.1} parent=5 // pred_region
        %s119 = ssub.s32 %s11, 1
      $region12: #{_locked_dropout_impl.1} parent=5 // pred_fallthru
        _
      %p120 = scmp.lt.s32.totalorder %s11, 2
      // Predicated region
      $region13: #{_locked_dropout_impl.1} parent=5 // pred_check
        %p121 = pneg %p120
      $region14: #{_locked_dropout_impl.1} parent=5 // pred_check_branch
        %123 = sbr.rel (%p121) target = $region16
      $region15: #{_locked_dropout_impl.1} parent=5 // pred_region
        // Predicated region
        $region17: #{_locked_dropout_impl.1} parent=15 // pred_check
          %p124 = pneg %p45
        $region18: #{_locked_dropout_impl.1} parent=15 // pred_check_branch
          %126 = sbr.rel (%p124) target = $region20
        $region19: #{_locked_dropout_impl.1} parent=15 // pred_region
          %p127 = scmp.lt.s32.totalorder %s18, 1
          %s128 = scalar_select %p127, %s18, 1
          %p129 = scmp.lt.s32.totalorder %s19, 0
          %s130 = scalar_select %p129, %s19, 0
          %s131 = sadd.s32 %s130, %s128
          %s132 = smul.addr %s131, 8
          %s133 = scalar_lea.vmem %s0, %s132
        $region20: #{_locked_dropout_impl.1} parent=15 // pred_fallthru
          _
        // Predicated region
        $region21: #{_locked_dropout_impl.1} parent=15 // pred_check
          %p134 = pneg %p71
        $region22: #{_locked_dropout_impl.1} parent=15 // pred_check_branch
          %136 = sbr.rel (%p134) target = $region24
        $region23: #{_locked_dropout_impl.1} parent=15 // pred_region
          %p137 = scmp.lt.s32.totalorder %s18, 1
          %s138 = scalar_select %p137, %s18, 1
          %s139 = scalar_lea.vmem %s1, %s138
        $region24: #{_locked_dropout_impl.1} parent=15 // pred_fallthru
          _
      $region16: #{_locked_dropout_impl.1} parent=5 // pred_fallthru
        _
      %p140 = scmp.le.s32.totalorder 1, %s11
      %p141 = scmp.lt.s32.totalorder %s11, 3
      %p142 = pnand %p140, %p141
      %p143 = pneg %p142
      // Predicated region
      $region25: #{_locked_dropout_impl.1} parent=5 // pred_check
        _
      $region26: #{_locked_dropout_impl.1} parent=5 // pred_check_branch
        %145 = sbr.rel (%p142) target = $region28
      $region27: #{_locked_dropout_impl.1} parent=5 // pred_region
        %s146 = ssub.s32 %s11, 1
        %p147 = scmp.lt.s32.totalorder %s20, 1
        %s148 = scalar_select %p147, %s20, 1
        %p149 = scmp.lt.s32.totalorder %s21, 0
        %s150 = scalar_select %p149, %s21, 0
        %s151 = sadd.s32 %s150, %s148
        %s152 = smul.addr %s151, 8
        %s153 = scalar_lea.vmem %s0, %s152
        %p154 = pneg %p51
        %p155 = pneg %p48
        %p156 = scmp.lt.s32.totalorder %s20, 1
        %s157 = scalar_select %p156, %s20, 1
        %s158 = scalar_lea.vmem %s1, %s157
        %p159 = pneg %p77
        %p160 = pneg %p74
        %p161 = pneg %p105
        %p162 = pneg %p102
        %s163 = sand.u32 %s92, 1
        %s164 = scalar_lea.sflag [#allocation3], %s163
        %s165 = sand.u32 %s92, 1
        %s166 = smul.addr %s165, 8
        %s167 = scalar_lea.vmem [#allocation2], %s166
        %p168 = scmp.lt.s32.totalorder %s20, 1
        %s169 = scalar_select %p168, %s20, 1
        %p170 = scmp.lt.s32.totalorder %s21, 0
        %s171 = scalar_select %p170, %s21, 0
        %s172 = sadd.s32 %s171, %s169
        %s173 = smul.addr %s172, 8
        %s174 = scalar_lea.vmem %s0, %s173
        %p175 = scmp.lt.s32.totalorder %s20, 1
        %s176 = scalar_select %p175, %s20, 1
        %s177 = scalar_lea.vmem %s1, %s176
        %v178 = vld [vmem:[%s174] sm:$0xff]
        %v179 = vld [vmem:[%s177] sm:$0x1]
        %v181 = vperm.slane %v179, 0
        %v183 = vmul.f32 %v178, %v181
        %184 = vst [vmem:[%s167] sm:$0xff] %v183
        %s185 = sand.u32 %s92, 1
        %s186 = scalar_lea.sflag [#allocation3], %s185
        %s187 = sand.u32 %s92, 1
        %s188 = smul.addr %s187, 8
        %s189 = scalar_lea.vmem [#allocation2], %s188
        // Predicated region
        $region29: #{_locked_dropout_impl.1} parent=27 // pred_check
          %p190 = pneg %p102
        $region30: #{_locked_dropout_impl.1} parent=27 // pred_check_branch
          %192 = sbr.rel (%p190) target = $region32
        $region31: #{_locked_dropout_impl.1} parent=27 // pred_region
          %194 = vsyncadd %s186, 0
          %s195 = sadd.s32 %s21, %s20
          %s196 = smul.addr %s195, 8
          %s197 = scalar_lea.hbm %s2, %s196
          %s199 = sshll.u32 %s189, 4
          %s200 = int_to_ptr.vmem [resolvable:$true] %s199
          %s201 = sshll.u32 %s197, 4
          %s202 = int_to_ptr.hbm [resolvable:$true] %s201
          %204 = dma.vmem_to_hbm [thread:$0]  %s200, 128, %s202, %s186
        $region32: #{_locked_dropout_impl.1} parent=27 // pred_fallthru
          _
      $region28: #{_locked_dropout_impl.1} parent=5 // pred_fallthru
        _
      %p205 = scmp.le.s32.totalorder 2, %s11
      // Predicated region
      $region33: #{_locked_dropout_impl.1} parent=5 // pred_check
        %p206 = pneg %p205
      $region34: #{_locked_dropout_impl.1} parent=5 // pred_check_branch
        %208 = sbr.rel (%p206) target = $region36
      $region35: #{_locked_dropout_impl.1} parent=5 // pred_region
        %s209 = ssub.s32 %s11, 2
        // Predicated region
        $region37: #{_locked_dropout_impl.1} parent=35 // pred_check
          %p210 = pneg %p108
        $region38: #{_locked_dropout_impl.1} parent=35 // pred_check_branch
          %212 = sbr.rel (%p210) target = $region40
        $region39: #{_locked_dropout_impl.1} parent=35 // pred_region
          %s213 = sand.u32 %s93, 1
          %s214 = scalar_lea.sflag [#allocation3], %s213
          %s215 = sand.u32 %s93, 1
          %s216 = smul.addr %s215, 8
          %s217 = scalar_lea.vmem [#allocation2], %s216
          %219 = dma.done %s214, 128
        $region40: #{_locked_dropout_impl.1} parent=35 // pred_fallthru
          _
      $region36: #{_locked_dropout_impl.1} parent=5 // pred_fallthru
        _
    $region6: #{_locked_dropout_impl.1} parent=1 // loop_footer
      %s15 = sadd.s32 1, %s11
    $region7: #{_locked_dropout_impl.1} parent=1 // loop_footer_branch
      %10 = sbr.rel target = $region3
    $region8: #{_locked_dropout_impl.1} parent=1 // loop_exit
      _
    %220 = vsyncpa [#allocation3], 1
    %s221 = scalar_lea.sflag [#allocation3], 1
    %222 = vsyncpa %s221, 1

</llo_original>
